<compile_context>
chip_gen: v6e
topology: v6e:2x2x1
jax: 0.10.0
libtpu: 0.0.40
codegen_flags: <defaults>
</compile_context>

<pallas_src>
import math

import jax
import jax.numpy as jnp
from jax.experimental import pallas as pl
from jax.experimental.pallas import tpu as pltpu


# ----------------------------------------------------------------------------
# helpers
# ----------------------------------------------------------------------------
def _round_up(x, m):
    return ((x + m - 1) // m) * m


def _pad2(a, rows, cols):
    R, C = a.shape
    if R == rows and C == cols:
        return a
    return jnp.pad(a, ((0, rows - R), (0, cols - C)))


_VMEM_LIMIT_BYTES = 48 * 1024 * 1024   # safe on v5e/v6e (128 MiB) and v7x (64 MiB)
_XF_RESIDENT_BUDGET = 8 * 1024 * 1024  # keep XF fully resident below this size


# ----------------------------------------------------------------------------
# Small matmul with fully-resident RHS:
#   out = a @ b ; b sits in VMEM for the whole kernel, a is row-tiled.
#   LHS is cast to the RHS dtype (bf16) IN-KERNEL so no wrapper cast pass is
#   needed on the streamed operand.  Used for XF = x @ filters and for the
#   x=None path (transform @ filters).
# ----------------------------------------------------------------------------
def _matmul_resident_rhs_kernel(a_ref, b_ref, o_ref):
    o_ref[...] = jnp.dot(
        a_ref[...].astype(b_ref.dtype), b_ref[...],
        preferred_element_type=jnp.float32,
    ).astype(o_ref.dtype)


def pallas_matmul_resident(a, b, *, tm=512, out_dtype=jnp.float32,
                           pad_rows_to=None, pad_cols_to=None):
    """a @ b with b fully resident in VMEM. a: [M,K], b: [K,N] -> [rows, cols]."""
    M, K = a.shape
    K2, N = b.shape
    assert K == K2, "inner dims must match"

    rows = max(M, pad_rows_to or 0)
    cols = max(N, pad_cols_to or 0)

    K_pad = _round_up(K, 128)
    N_pad = _round_up(cols, 128)
    tm = min(tm, _round_up(rows, 8))
    M_pad = _round_up(rows, tm)

    a_p = _pad2(a, M_pad, K_pad)                       # streamed, cast in-kernel
    b_p = _pad2(b, K_pad, N_pad).astype(jnp.bfloat16)  # small, resident

    out = pl.pallas_call(
        _matmul_resident_rhs_kernel,
        out_shape=jax.ShapeDtypeStruct((M_pad, N_pad), out_dtype),
        grid_spec=pltpu.PrefetchScalarGridSpec(
            num_scalar_prefetch=0,
            grid=(M_pad // tm,),
            in_specs=[
                pl.BlockSpec((tm, K_pad), lambda i: (i, 0)),
                pl.BlockSpec((K_pad, N_pad), lambda i: (0, 0)),   # resident RHS
            ],
            out_specs=pl.BlockSpec((tm, N_pad), lambda i: (i, 0)),
        ),
        compiler_params=pltpu.CompilerParams(
            dimension_semantics=("parallel",),
            vmem_limit_bytes=_VMEM_LIMIT_BYTES,
        ),
    )(a_p, b_p)
    return out[:rows, :cols]


# ----------------------------------------------------------------------------
# Main GCN aggregation kernel:  out = transform @ XF
#   grid = (M_tiles, K_tiles) ; K = node dimension (reduction, last, arbitrary)
#   transform tile : (tm, tk) f32, cast to bf16 in-kernel
#   XF             : fully resident (K_pad, C_pad) bf16 (sliced per k-step),
#                    or k-tiled (tk, C_pad) if too big for residency.
#   Output block (i, 0) is resident across the k axis -> accumulate directly.
# ----------------------------------------------------------------------------
def _gcn_spmm_kernel(t_ref, xf_ref, o_ref):
    k = pl.program_id(1)
    tk = t_ref.shape[1]

    @pl.when(k == 0)
    def _():
        o_ref[...] = jnp.zeros_like(o_ref)

    if xf_ref.shape[0] == tk:
        # XF arrives already k-tiled (or there is a single k step).
        xf_blk = xf_ref[...]
    else:
        # XF fully resident: slice this step's rows (sublane-aligned: tk % 128 == 0).
        start = pl.multiple_of(k * tk, tk)
        xf_blk = xf_ref[pl.ds(start, tk), :]

    o_ref[...] += jnp.dot(
        t_ref[...].astype(jnp.bfloat16), xf_blk,
        preferred_element_type=jnp.float32,
    )


def gcn_forward(transform, x, filters, *, tm=512, tk=1024):
    """transform @ (x @ filters) -> [M, C] float32."""
    M, K = transform.shape
    K2, F = x.shape
    F2, C = filters.shape
    assert K == K2 and F == F2, "shape mismatch"

    # --- tiling decisions -----------------------------------------------
    tm = min(tm, _round_up(M, 8))
    # On big graphs keep >= 2 M-tiles so the "parallel" axis can shard across
    # both v7x TensorCores.
    if M > 512:
        tm = min(tm, _round_up((M + 1) // 2, 8))
    M_pad = _round_up(M, tm)

    tk = min(tk, _round_up(K, 128))
    K_pad = _round_up(K, tk)
    C_pad = _round_up(C, 128)

    # --- stage 1: XF = x @ filters, computed once, bf16, pre-padded ------
    xf = pallas_matmul_resident(
        x, filters, out_dtype=jnp.bfloat16,
        pad_rows_to=K_pad, pad_cols_to=C_pad,
    )

    # --- stage 2: out = transform @ XF ------------------------------------
    # transform streamed in its original dtype (f32), cast to bf16 in-kernel.
    t_p = _pad2(transform, M_pad, K_pad)

    xf_bytes = K_pad * C_pad * 2
    if xf_bytes <= _XF_RESIDENT_BUDGET:
        xf_spec = pl.BlockSpec((K_pad, C_pad), lambda i, k: (0, 0))   # resident
    else:
        xf_spec = pl.BlockSpec((tk, C_pad), lambda i, k: (k, 0))      # k-tiled

    out = pl.pallas_call(
        _gcn_spmm_kernel,
        out_shape=jax.ShapeDtypeStruct((M_pad, C_pad), jnp.float32),
        grid_spec=pltpu.PrefetchScalarGridSpec(
            num_scalar_prefetch=0,
            grid=(M_pad // tm, K_pad // tk),
            in_specs=[
                pl.BlockSpec((tm, tk), lambda i, k: (i, k)),
                xf_spec,
            ],
            out_specs=pl.BlockSpec((tm, C_pad), lambda i, k: (i, 0)),
        ),
        compiler_params=pltpu.CompilerParams(
            dimension_semantics=("parallel", "arbitrary"),
            vmem_limit_bytes=_VMEM_LIMIT_BYTES,
        ),
    )(t_p, xf)
    return out[:M, :C]


# ----------------------------------------------------------------------------
# Module-equivalent wrapper
# ----------------------------------------------------------------------------
class KipfAndWillingConv:
    def __init__(self, n_features, n_filters, key):
        # xavier_normal_ with gain=1.0: std = sqrt(2 / (fan_in + fan_out))
        std = math.sqrt(2.0 / (n_features + n_filters))
        self.filters = std * jax.random.normal(
            key, (n_features, n_filters), dtype=jnp.float32
        )

    def forward(self, transform, x=None):
        # TODO(synk): torch.sparse.mm is implemented as a dense tiled matmul
        # (transform is materialized dense); no sparse-format Pallas path here.
        if x is not None:
            return gcn_forward(transform, x, self.filters)
        return pallas_matmul_resident(transform, self.filters)

    @staticmethod
    def compute_transform(A):
        # Glue (not the hot path): D^{-1/2} A D^{-1/2}
        d = jnp.sum(A, axis=1)
        d_inv_sqrt = jnp.power(d, -0.5)
        d_inv_sqrt = jnp.where(jnp.isinf(d_inv_sqrt), 0.0, d_inv_sqrt)
        return (A * d_inv_sqrt[:, None]) * d_inv_sqrt[None, :]


# ----------------------------------------------------------------------------
# Demo / self-check
# ----------------------------------------------------------------------------
if __name__ == "__main__":
    N_NODES, N_FEATURES, N_FILTERS = 128, 64, 32

    key = jax.random.PRNGKey(0)
    k_param, k_adj, k_x, k_t2 = jax.random.split(key, 4)

    conv = KipfAndWillingConv(N_FEATURES, N_FILTERS, k_param)

    # Build a symmetric "adjacency" with self-loops and normalize it.
    raw = jax.random.uniform(k_adj, (N_NODES, N_NODES), dtype=jnp.float32)
    A = (raw > 0.8).astype(jnp.float32)
    A = jnp.maximum(A, A.T) + jnp.eye(N_NODES, dtype=jnp.float32)
    transform = KipfAndWillingConv.compute_transform(A)

    x = jax.random.normal(k_x, (N_NODES, N_FEATURES), dtype=jnp.float32)

    # Path 1: x provided -> transform @ (x @ filters)
    out = conv.forward(transform, x)
    out = jax.block_until_ready(out)
    ref = transform @ (x @ conv.filters)
    assert out.shape == (N_NODES, N_FILTERS)
    # bf16 MXU operands with f32 accumulation -> loose tolerance vs f32 ref.
    assert jnp.allclose(out, ref, atol=5e-2, rtol=5e-2), (
        float(jnp.max(jnp.abs(out - ref)))
    )

    # Path 2: x is None -> transform2 @ filters (transform2 has n_features cols)
    transform2 = jax.random.normal(k_t2, (N_NODES, N_FEATURES), dtype=jnp.float32)
    out2 = conv.forward(transform2, None)
    out2 = jax.block_until_ready(out2)
    ref2 = transform2 @ conv.filters
    assert out2.shape == (N_NODES, N_FILTERS)
    assert jnp.allclose(out2, ref2, atol=5e-2, rtol=5e-2), (
        float(jnp.max(jnp.abs(out2 - ref2)))
    )

    print("KERNEL_OK")
</pallas_src>

<mosaic_0001>
module attributes {stable_mosaic.version = 11 : i64} {
  func.func @_matmul_resident_rhs_kernel(%arg0: i32, %arg1: memref<128x128xf32, #tpu.memory_space<vmem>>, %arg2: memref<128x128xbf16, #tpu.memory_space<vmem>>, %arg3: memref<128x128xbf16, #tpu.memory_space<vmem>>) attributes {dimension_semantics = [#tpu.dimension_semantics<parallel>], iteration_bounds = array<i64: 1>, scalar_prefetch = 0 : i64, scratch_operands = 0 : i64, tpu.core_type = #tpu.core_type<tc>, window_params = [{transform_indices = @transform_0, window_bounds = array<i64: 128, 128>}, {pipeline_mode = #tpu.pipeline_mode<synchronous>, transform_indices = @transform_1, window_bounds = array<i64: 128, 128>}, {transform_indices = @transform_2, window_bounds = array<i64: 128, 128>}]} {
    %c0 = arith.constant 0 : index
    %c0_0 = arith.constant 0 : index
    %0 = vector.load %arg1[%c0, %c0_0] : memref<128x128xf32, #tpu.memory_space<vmem>>, vector<128x128xf32>
    %1 = arith.truncf %0 : vector<128x128xf32> to vector<128x128xbf16>
    %c0_1 = arith.constant 0 : index
    %c0_2 = arith.constant 0 : index
    %2 = vector.load %arg2[%c0_1, %c0_2] : memref<128x128xbf16, #tpu.memory_space<vmem>>, vector<128x128xbf16>
    %cst = arith.constant dense<0.000000e+00> : vector<128x128xf32>
    %3 = tpu.matmul %1, %2, %cst {dimension_numbers = #tpu.dot_dimension_numbers<[1], [0], [0], [1], [0, 0, 1, 1], [], []>} : vector<128x128xbf16>, vector<128x128xbf16>, vector<128x128xf32> -> vector<128x128xf32>
    %4 = arith.truncf %3 : vector<128x128xf32> to vector<128x128xbf16>
    %c0_3 = arith.constant 0 : index
    %c0_4 = arith.constant 0 : index
    %5 = vector.load %arg3[%c0_3, %c0_4] : memref<128x128xbf16, #tpu.memory_space<vmem>>, vector<128x128xbf16>
    tpu.vector_store %arg3[%c0_3, %c0_4], %4 {strides = array<i32>} : memref<128x128xbf16, #tpu.memory_space<vmem>>, vector<128x128xbf16>,
    return
  }
  func.func @transform_0(%arg0: i32) -> (i32, i32) {
    %c0_i32 = arith.constant 0 : i32
    %c0_i32_0 = arith.constant 0 : i32
    return %arg0, %c0_i32 : i32, i32
  }
  func.func @transform_1(%arg0: i32) -> (i32, i32) {
    %c0_i32 = arith.constant 0 : i32
    %c0_i32_0 = arith.constant 0 : i32
    %c0_i32_1 = arith.constant 0 : i32
    return %c0_i32, %c0_i32_0 : i32, i32
  }
  func.func @transform_2(%arg0: i32) -> (i32, i32) {
    %c0_i32 = arith.constant 0 : i32
    %c0_i32_0 = arith.constant 0 : i32
    return %arg0, %c0_i32 : i32, i32
  }
}

</mosaic_0001>

<llo_original>
// kernel: tpu_custom_call.1
$region0: #{tpu_custom_call.1}
  #allocation0 [shape = 'u32[]', space=smem, size = 0x4, offset = 0x4, fixed_abs, tag = 'smem constant byte address 0x4 - core index']
  #allocation1 [shape = 'u32[144,128]{1,0:T(1,128)}', space=vmem, size = 0x12000, scoped, tag = 'internal scratch']
  %s0 = inlined_call_operand.hbm [shape: f32[128,128], index: 0, kind: input, shape index: {}]
  %s1 = inlined_call_operand.hbm [shape: bf16[128,128], index: 1, kind: input, shape index: {}]
  %s2 = inlined_call_operand.hbm [shape: bf16[128,128], index: 2, kind: output, shape index: {}]
  %s3 = sld [smem:[#allocation0]]
  $region26: #{tpu_custom_call.1} parent=0
    _
  %s5 = ssub.s32 1, %s3
  %s6 = scalar_select 0, %s5, %s3
  $region1: #{tpu_custom_call.1} parent=0
    #allocation2 [shape = 'u8[65536]{0}', space=vmem, size = 0x10000, scoped, tag = 'input window, operand 0, single buffered']
    #allocation3 [shape = 's32[1]{0}', space=sflag, size = 0x4, scoped, tag = 'scoped memory for tpu_custom_call.1']
    #allocation4 [shape = 's32[1]{0}', space=sflag, size = 0x4, scoped, tag = 'scoped memory for tpu_custom_call.1']
    #allocation5 [shape = 'u8[32768]{0}', space=vmem, size = 0x8000, scoped, tag = 'input window, operand 1, single buffered']
    #allocation6 [shape = 's32[1]{0}', space=sflag, size = 0x4, scoped, tag = 'scoped memory for tpu_custom_call.1']
    #allocation7 [shape = 'u8[32768]{0}', space=vmem, size = 0x8000, scoped, tag = 'output window, operand 0, single buffered']
    %7 = vsyncpa [#allocation3], 0
    %8 = vsyncpa [#allocation6], 0
    %9 = vsyncpa [#allocation4], 0
    // Predicated region
    $region2: #{tpu_custom_call.1} parent=1 // pred_check
      _
    $region3: #{tpu_custom_call.1} parent=1 // pred_check_branch
      %11 = sbr.rel (0) target = $region5
    $region4: #{tpu_custom_call.1} parent=1 // pred_region
      %s13 = ssub.s32 2048, 2048
      %14 = vsyncadd [#allocation3], %s13
      %s15 = sshll.u32 [#allocation2], 4
      %s16 = int_to_ptr.vmem [resolvable:$true] %s15
      %21 = dma.hbm_to_vmem [thread:$0]  %s0, 2048, %s16, [#allocation3], 128, 128, 8
    $region5: #{tpu_custom_call.1} parent=1 // pred_fallthru
      _
    // Predicated region
    $region6: #{tpu_custom_call.1} parent=1 // pred_check
      _
    $region7: #{tpu_custom_call.1} parent=1 // pred_check_branch
      %23 = sbr.rel (0) target = $region9
    $region8: #{tpu_custom_call.1} parent=1 // pred_region
      %s25 = ssub.s32 1024, 1024
      %26 = vsyncadd [#allocation6], %s25
      %s27 = sshll.u32 [#allocation5], 4
      %s28 = int_to_ptr.vmem [resolvable:$true] %s27
      %33 = dma.hbm_to_vmem [thread:$0]  %s1, 1024, %s28, [#allocation6], 64, 64, 4
    $region9: #{tpu_custom_call.1} parent=1 // pred_fallthru
      _
    // Predicated region
    $region10: #{tpu_custom_call.1} parent=1 // pred_check
      _
    $region11: #{tpu_custom_call.1} parent=1 // pred_check_branch
      %35 = sbr.rel (0) target = $region13
    $region12: #{tpu_custom_call.1} parent=1 // pred_region
      %36 = dma.done [#allocation3], 2048
    $region13: #{tpu_custom_call.1} parent=1 // pred_fallthru
      _
    // Predicated region
    $region14: #{tpu_custom_call.1} parent=1 // pred_check
      _
    $region15: #{tpu_custom_call.1} parent=1 // pred_check_branch
      %38 = sbr.rel (0) target = $region17
    $region16: #{tpu_custom_call.1} parent=1 // pred_region
      %39 = dma.done [#allocation6], 1024
    $region17: #{tpu_custom_call.1} parent=1 // pred_fallthru
      _
    %v41 = vld [vmem:[#allocation2] sm:$0xff]
    %v42 = vld [vmem:[#allocation2 + $0x8] sm:$0xff]
    %v43 = vld [vmem:[#allocation2 + $0x10] sm:$0xff]
    %v44 = vld [vmem:[#allocation2 + $0x18] sm:$0xff]
    %v45 = vld [vmem:[#allocation2 + $0x20] sm:$0xff]
    %v46 = vld [vmem:[#allocation2 + $0x28] sm:$0xff]
    %v47 = vld [vmem:[#allocation2 + $0x30] sm:$0xff]
    %v48 = vld [vmem:[#allocation2 + $0x38] sm:$0xff]
    %v49 = vld [vmem:[#allocation2 + $0x40] sm:$0xff]
    %v50 = vld [vmem:[#allocation2 + $0x48] sm:$0xff]
    %v51 = vld [vmem:[#allocation2 + $0x50] sm:$0xff]
    %v52 = vld [vmem:[#allocation2 + $0x58] sm:$0xff]
    %v53 = vld [vmem:[#allocation2 + $0x60] sm:$0xff]
    %v54 = vld [vmem:[#allocation2 + $0x68] sm:$0xff]
    %v55 = vld [vmem:[#allocation2 + $0x70] sm:$0xff]
    %v56 = vld [vmem:[#allocation2 + $0x78] sm:$0xff]
    %v57 = vpack.c.bf16 %v42, %v41
    %v58 = vpack.c.bf16 %v44, %v43
    %v59 = vpack.c.bf16 %v46, %v45
    %v60 = vpack.c.bf16 %v48, %v47
    %v61 = vpack.c.bf16 %v50, %v49
    %v62 = vpack.c.bf16 %v52, %v51
    %v63 = vpack.c.bf16 %v54, %v53
    %v64 = vpack.c.bf16 %v56, %v55
    %v65 = vld [vmem:[#allocation5] sm:$0xf]
    %v66 = vld [vmem:[#allocation5 + $0x4] sm:$0xf]
    %v67 = vld [vmem:[#allocation5 + $0x8] sm:$0xf]
    %v68 = vld [vmem:[#allocation5 + $0xc] sm:$0xf]
    %v69 = vld [vmem:[#allocation5 + $0x10] sm:$0xf]
    %v70 = vld [vmem:[#allocation5 + $0x14] sm:$0xf]
    %v71 = vld [vmem:[#allocation5 + $0x18] sm:$0xf]
    %v72 = vld [vmem:[#allocation5 + $0x1c] sm:$0xf]
    %v73 = vld [vmem:[#allocation5 + $0x20] sm:$0xf]
    %v74 = vld [vmem:[#allocation5 + $0x24] sm:$0xf]
    %v75 = vld [vmem:[#allocation5 + $0x28] sm:$0xf]
    %v76 = vld [vmem:[#allocation5 + $0x2c] sm:$0xf]
    %v77 = vld [vmem:[#allocation5 + $0x30] sm:$0xf]
    %v78 = vld [vmem:[#allocation5 + $0x34] sm:$0xf]
    %v79 = vld [vmem:[#allocation5 + $0x38] sm:$0xf]
    %v80 = vld [vmem:[#allocation5 + $0x3c] sm:$0xf]
    %v97 = vunpack.c.l.b16 %v65
    %v98 = vunpack.c.l.b16 %v66
    %v99 = vunpack.c.l.b16 %v67
    %v100 = vunpack.c.l.b16 %v68
    %v101 = vunpack.c.l.b16 %v69
    %v102 = vunpack.c.l.b16 %v70
    %v103 = vunpack.c.l.b16 %v71
    %v104 = vunpack.c.l.b16 %v72
    %v105 = vunpack.c.l.b16 %v73
    %v106 = vunpack.c.l.b16 %v74
    %v107 = vunpack.c.l.b16 %v75
    %v108 = vunpack.c.l.b16 %v76
    %v109 = vunpack.c.l.b16 %v77
    %v110 = vunpack.c.l.b16 %v78
    %v111 = vunpack.c.l.b16 %v79
    %v112 = vunpack.c.l.b16 %v80
    %v113 = vpack.c.b16 %v98, %v97
    %v114 = vpack.c.b16 %v100, %v99
    %v115 = vpack.c.b16 %v102, %v101
    %v116 = vpack.c.b16 %v104, %v103
    %v117 = vpack.c.b16 %v106, %v105
    %v118 = vpack.c.b16 %v108, %v107
    %v119 = vpack.c.b16 %v110, %v109
    %v120 = vpack.c.b16 %v112, %v111
    %129 = vmatprep.subr.bf16.mxu0 0
    %130 = vmatpush1.bf16.msra.mxu0 %v120
    %131 = vmatprep.subr.bf16.mxu0 0
    %132 = vmatpush1.bf16.msra.mxu0 %v119
    %133 = vmatprep.subr.bf16.mxu0 0
    %134 = vmatpush1.bf16.msra.mxu0 %v118
    %135 = vmatprep.subr.bf16.mxu0 0
    %136 = vmatpush1.bf16.msra.mxu0 %v117
    %137 = vmatprep.subr.bf16.mxu0 0
    %138 = vmatpush1.bf16.msra.mxu0 %v116
    %139 = vmatprep.subr.bf16.mxu0 0
    %140 = vmatpush1.bf16.msra.mxu0 %v115
    %141 = vmatprep.subr.bf16.mxu0 0
    %142 = vmatpush1.bf16.msra.mxu0 %v114
    %143 = vmatprep.subr.bf16.mxu0 0
    %144 = vmatpush1.bf16.msra.mxu0 %v113
    %145 = vmatprep.subr.bf16.mxu0 0
    %146 = vmatpush2.bf16.msra.mxu0 0
    %147 = vmatprep.subr.bf16.mxu0 0
    %148 = vmatpush2.bf16.msra.mxu0 0
    %149 = vmatprep.subr.bf16.mxu0 0
    %150 = vmatpush2.bf16.msra.mxu0 0
    %151 = vmatprep.subr.bf16.mxu0 0
    %152 = vmatpush2.bf16.msra.mxu0 0
    %153 = vmatprep.subr.bf16.mxu0 0
    %154 = vmatpush2.bf16.msra.mxu0 0
    %155 = vmatprep.subr.bf16.mxu0 0
    %156 = vmatpush2.bf16.msra.mxu0 0
    %157 = vmatprep.subr.bf16.mxu0 0
    %158 = vmatpush2.bf16.msra.mxu0 0
    %159 = vmatprep.subr.bf16.mxu0 0
    %160 = vmatpush2.bf16.msra.mxu0 0
    %161 = vmatprep.mubr.bf16.mxu0 0
    %162 = vmatmul.mubr.bf16.gmra.mxu0 %v57
    %v163 = vpop.f32.mrf.mxu0
    %v164 = vadd.f32 0.0, %v163
    %v165 = vpop.f32.mrf.mxu0
    %v166 = vpop.f32.mrf.mxu0
    %v167 = vadd.f32 0.0, %v166
    %v168 = vpop.f32.mrf.mxu0
    %169 = vmatprep.mubr.bf16.mxu0 0
    %170 = vmatmul.mubr.bf16.gmra.mxu0 %v58
    %v171 = vpop.f32.mrf.mxu0
    %v172 = vadd.f32 0.0, %v171
    %v173 = vpop.f32.mrf.mxu0
    %v174 = vpop.f32.mrf.mxu0
    %v175 = vadd.f32 0.0, %v174
    %v176 = vpop.f32.mrf.mxu0
    %177 = vmatprep.mubr.bf16.mxu0 0
    %178 = vmatmul.mubr.bf16.gmra.mxu0 %v59
    %v179 = vpop.f32.mrf.mxu0
    %v180 = vadd.f32 0.0, %v179
    %v181 = vpop.f32.mrf.mxu0
    %v182 = vpop.f32.mrf.mxu0
    %v183 = vadd.f32 0.0, %v182
    %v184 = vpop.f32.mrf.mxu0
    %185 = vmatprep.mubr.bf16.mxu0 0
    %186 = vmatmul.mubr.bf16.gmra.mxu0 %v60
    %v187 = vpop.f32.mrf.mxu0
    %v188 = vadd.f32 0.0, %v187
    %v189 = vpop.f32.mrf.mxu0
    %v190 = vpop.f32.mrf.mxu0
    %v191 = vadd.f32 0.0, %v190
    %v192 = vpop.f32.mrf.mxu0
    %193 = vmatprep.mubr.bf16.mxu0 0
    %194 = vmatmul.mubr.bf16.gmra.mxu0 %v61
    %v195 = vpop.f32.mrf.mxu0
    %v196 = vadd.f32 0.0, %v195
    %v197 = vpop.f32.mrf.mxu0
    %v198 = vpop.f32.mrf.mxu0
    %v199 = vadd.f32 0.0, %v198
    %v200 = vpop.f32.mrf.mxu0
    %201 = vmatprep.mubr.bf16.mxu0 0
    %202 = vmatmul.mubr.bf16.gmra.mxu0 %v62
    %v203 = vpop.f32.mrf.mxu0
    %v204 = vadd.f32 0.0, %v203
    %v205 = vpop.f32.mrf.mxu0
    %v206 = vpop.f32.mrf.mxu0
    %v207 = vadd.f32 0.0, %v206
    %v208 = vpop.f32.mrf.mxu0
    %209 = vmatprep.mubr.bf16.mxu0 0
    %210 = vmatmul.mubr.bf16.gmra.mxu0 %v63
    %v211 = vpop.f32.mrf.mxu0
    %v212 = vadd.f32 0.0, %v211
    %v213 = vpop.f32.mrf.mxu0
    %v214 = vpop.f32.mrf.mxu0
    %v215 = vadd.f32 0.0, %v214
    %v216 = vpop.f32.mrf.mxu0
    %217 = vmatprep.mubr.bf16.mxu0 0
    %218 = vmatmul.mubr.bf16.gmra.mxu0 %v64
    %v219 = vpop.f32.mrf.mxu0
    %v220 = vadd.f32 0.0, %v219
    %v221 = vpop.f32.mrf.mxu0
    %v222 = vpop.f32.mrf.mxu0
    %v223 = vadd.f32 0.0, %v222
    %v224 = vpop.f32.mrf.mxu0
    %225 = vdwg.mxu0
    %v226 = vpack.c.bf16 %v167, %v164
    %v227 = vpack.c.bf16 %v175, %v172
    %v228 = vpack.c.bf16 %v183, %v180
    %v229 = vpack.c.bf16 %v191, %v188
    %v230 = vpack.c.bf16 %v199, %v196
    %v231 = vpack.c.bf16 %v207, %v204
    %v232 = vpack.c.bf16 %v215, %v212
    %v233 = vpack.c.bf16 %v223, %v220
    %v242 = vunpack.c.l.b16 %v226
    %v243 = vunpack.c.h.b16 %v226
    %v244 = vunpack.c.l.b16 %v227
    %v245 = vunpack.c.h.b16 %v227
    %v246 = vunpack.c.l.b16 %v228
    %v247 = vunpack.c.h.b16 %v228
    %v248 = vunpack.c.l.b16 %v229
    %v249 = vunpack.c.h.b16 %v229
    %v250 = vunpack.c.l.b16 %v230
    %v251 = vunpack.c.h.b16 %v230
    %v252 = vunpack.c.l.b16 %v231
    %v253 = vunpack.c.h.b16 %v231
    %v254 = vunpack.c.l.b16 %v232
    %v255 = vunpack.c.h.b16 %v232
    %v256 = vunpack.c.l.b16 %v233
    %v257 = vunpack.c.h.b16 %v233
    %v258 = vpack.c.b16 %v242, %v242
    %v259 = vpack.c.b16 %v243, %v243
    %v260 = vpack.c.b16 %v244, %v244
    %v261 = vpack.c.b16 %v245, %v245
    %v262 = vpack.c.b16 %v246, %v246
    %v263 = vpack.c.b16 %v247, %v247
    %v264 = vpack.c.b16 %v248, %v248
    %v265 = vpack.c.b16 %v249, %v249
    %v266 = vpack.c.b16 %v250, %v250
    %v267 = vpack.c.b16 %v251, %v251
    %v268 = vpack.c.b16 %v252, %v252
    %v269 = vpack.c.b16 %v253, %v253
    %v270 = vpack.c.b16 %v254, %v254
    %v271 = vpack.c.b16 %v255, %v255
    %v272 = vpack.c.b16 %v256, %v256
    %v273 = vpack.c.b16 %v257, %v257
    %290 = vst [vmem:[#allocation7] sm:$0xf] %v258
    %291 = vst [vmem:[#allocation7 + $0x4] sm:$0xf] %v259
    %292 = vst [vmem:[#allocation7 + $0x8] sm:$0xf] %v260
    %293 = vst [vmem:[#allocation7 + $0xc] sm:$0xf] %v261
    %294 = vst [vmem:[#allocation7 + $0x10] sm:$0xf] %v262
    %295 = vst [vmem:[#allocation7 + $0x14] sm:$0xf] %v263
    %296 = vst [vmem:[#allocation7 + $0x18] sm:$0xf] %v264
    %297 = vst [vmem:[#allocation7 + $0x1c] sm:$0xf] %v265
    %298 = vst [vmem:[#allocation7 + $0x20] sm:$0xf] %v266
    %299 = vst [vmem:[#allocation7 + $0x24] sm:$0xf] %v267
    %300 = vst [vmem:[#allocation7 + $0x28] sm:$0xf] %v268
    %301 = vst [vmem:[#allocation7 + $0x2c] sm:$0xf] %v269
    %302 = vst [vmem:[#allocation7 + $0x30] sm:$0xf] %v270
    %303 = vst [vmem:[#allocation7 + $0x34] sm:$0xf] %v271
    %304 = vst [vmem:[#allocation7 + $0x38] sm:$0xf] %v272
    %305 = vst [vmem:[#allocation7 + $0x3c] sm:$0xf] %v273
    // Predicated region
    $region18: #{tpu_custom_call.1} parent=1 // pred_check
      _
    $region19: #{tpu_custom_call.1} parent=1 // pred_check_branch
      %307 = sbr.rel (0) target = $region21
    $region20: #{tpu_custom_call.1} parent=1 // pred_region
      %s309 = ssub.s32 1024, 1024
      %310 = vsyncadd [#allocation4], %s309
      %s311 = sshll.u32 [#allocation7], 4
      %s312 = int_to_ptr.vmem [resolvable:$true] %s311
      %317 = dma.vmem_to_hbm [thread:$0]  %s312, 1024, %s2, [#allocation4], 64, 64, 4
    $region21: #{tpu_custom_call.1} parent=1 // pred_fallthru
      _
    // Predicated region
    $region22: #{tpu_custom_call.1} parent=1 // pred_check
      _
    $region23: #{tpu_custom_call.1} parent=1 // pred_check_branch
      %319 = sbr.rel (0) target = $region25
    $region24: #{tpu_custom_call.1} parent=1 // pred_region
      %320 = dma.done [#allocation4], 1024
    $region25: #{tpu_custom_call.1} parent=1 // pred_fallthru
      _
    %321 = vsyncpa [#allocation3], 1
    %322 = vsyncpa [#allocation6], 1
    %323 = vsyncpa [#allocation4], 1

</llo_original>
